<compile_context>
chip_gen: v7x
topology: tpu7x:2x2x1
jax: 0.10.0
libtpu: 0.0.40
codegen_flags: <defaults>
</compile_context>

<pallas_src>
import functools

import jax
import jax.numpy as jnp
from jax.experimental import pallas as pl
from jax.experimental.pallas import tpu as pltpu

FEAT = 160    # per-client flattened feature size (reshape([-1, 160]))
HID = 32      # client model output width
HID2 = 64     # server hidden width
NCLS = 2      # server output classes

MAX_TB = 2048  # upper bound on the batch tile (VMEM: 2 inputs x 2 bufs x 1.3 MiB)


def _splitnn_kernel(x1_ref, x2_ref, w1_ref, b1_ref, w2_ref, b2_ref,
                    ws1_ref, bs1_ref, ws2_ref, bs2_ref, out_ref):
    # Client 1: Linear(160->32) + ReLU
    h1 = jnp.dot(x1_ref[...], w1_ref[...],
                 preferred_element_type=jnp.float32) + b1_ref[...]
    h1 = jnp.maximum(h1, 0.0)

    # Client 2: Linear(160->32) + ReLU
    h2 = jnp.dot(x2_ref[...], w2_ref[...],
                 preferred_element_type=jnp.float32) + b2_ref[...]
    h2 = jnp.maximum(h2, 0.0)

    # server_input = out1/2 + out2/2   (VPU, 2 vregs -> free)
    s = (h1 + h2) * 0.5

    # Server: Linear(32->64) + ReLU + Linear(64->2)
    z = jnp.dot(s, ws1_ref[...],
                preferred_element_type=jnp.float32) + bs1_ref[...]
    z = jnp.maximum(z, 0.0)
    out_ref[...] = (jnp.dot(z, ws2_ref[...],
                            preferred_element_type=jnp.float32)
                    + bs2_ref[...]).astype(out_ref.dtype)


def _round_up(x, m):
    return ((x + m - 1) // m) * m


def _pick_tb(B, max_tb=MAX_TB):
    """Batch tile: large (amortize per-step overhead, hit HBM roofline),
    multiple of 16 rows (sublane aligned for f32/bf16), and giving >= 2 grid
    steps when the batch allows it (keeps both v7x TensorCores busy)."""
    if B < 32:
        return B                                   # full-extent block, 1 step
    if B <= max_tb:
        return min(B, max(16, _round_up(pl.cdiv(B, 2), 16)))
    return max_tb


@jax.jit
def splitnn_forward(x1, x2, params):
    """x1, x2: per-owner inputs (any shape reshapable to [-1, 160], f32)."""
    x1 = x1.reshape(-1, FEAT)
    x2 = x2.reshape(-1, FEAT)
    B = x1.shape[0]
    tb = _pick_tb(B)

    (w1, b1), (w2, b2), (ws1, bs1), (ws2, bs2) = params

    grid = (pl.cdiv(B, tb),)
    full = lambda shape: pl.BlockSpec(shape, lambda i: (0, 0))
    batched = lambda shape: pl.BlockSpec(shape, lambda i: (i, 0))

    return pl.pallas_call(
        _splitnn_kernel,
        out_shape=jax.ShapeDtypeStruct((B, NCLS), jnp.float32),
        grid_spec=pltpu.PrefetchScalarGridSpec(
            num_scalar_prefetch=0,
            grid=grid,
            in_specs=[
                batched((tb, FEAT)),                  # x1 tile (f32, streamed)
                batched((tb, FEAT)),                  # x2 tile (f32, streamed)
                full((FEAT, HID)), full((1, HID)),    # client 1
                full((FEAT, HID)), full((1, HID)),    # client 2
                full((HID, HID2)), full((1, HID2)),   # server layer 1
                full((HID2, NCLS)), full((1, NCLS)),  # server layer 2
            ],
            out_specs=batched((tb, NCLS)),
        ),
        compiler_params=pltpu.CompilerParams(
            dimension_semantics=("parallel",)),
    )(x1, x2, w1, b1, w2, b2, ws1, bs1, ws2, bs2)


def init_params(key):
    ks = jax.random.split(key, 8)

    def lin(kw, kb, fan_in, fan_out):
        lim = 1.0 / (fan_in ** 0.5)
        w = jax.random.uniform(kw, (fan_in, fan_out), jnp.float32, -lim, lim)
        b = jax.random.uniform(kb, (1, fan_out), jnp.float32, -lim, lim)
        return w, b

    return (
        lin(ks[0], ks[1], FEAT, HID),    # client_1
        lin(ks[2], ks[3], FEAT, HID),    # client_2
        lin(ks[4], ks[5], HID, HID2),    # server layer 1
        lin(ks[6], ks[7], HID2, NCLS),   # server layer 2
    )


def reference_forward(x1, x2, params):
    """Pure-JAX (f32) mirror of SplitNN.forward."""
    (w1, b1), (w2, b2), (ws1, bs1), (ws2, bs2) = params
    x1 = x1.reshape(-1, FEAT)
    x2 = x2.reshape(-1, FEAT)
    h1 = jnp.maximum(x1 @ w1 + b1, 0.0)
    h2 = jnp.maximum(x2 @ w2 + b2, 0.0)
    s = h1 / 2 + h2 / 2
    z = jnp.maximum(s @ ws1 + bs1, 0.0)
    return z @ ws2 + bs2


if __name__ == "__main__":
    key = jax.random.PRNGKey(0)
    kp, k1, k2, k3, k4 = jax.random.split(key, 5)
    params = init_params(kp)

    # --- small case mirroring the module's .reshape([-1, 160]) --------------
    B = 8
    x1 = jax.random.normal(k1, (B, 1, FEAT), jnp.float32)
    x2 = jax.random.normal(k2, (B, 1, FEAT), jnp.float32)

    out = jax.block_until_ready(splitnn_forward(x1, x2, params))
    ref = reference_forward(x1, x2, params)
    assert out.shape == (B, NCLS)
    assert jnp.allclose(out, ref, atol=2e-3, rtol=2e-3)

    # --- larger batch exercising the tiled multi-step (2-grid-step) path ----
    B2 = 256
    x1b = jax.random.normal(k3, (B2, FEAT), jnp.float32)
    x2b = jax.random.normal(k4, (B2, FEAT), jnp.float32)
    out2 = jax.block_until_ready(splitnn_forward(x1b, x2b, params))
    ref2 = reference_forward(x1b, x2b, params)
    assert out2.shape == (B2, NCLS)
    assert jnp.allclose(out2, ref2, atol=2e-3, rtol=2e-3)

    print("KERNEL_OK")
</pallas_src>

<mosaic_0001>
module attributes {stable_mosaic.version = 11 : i64} {
  func.func @_splitnn_kernel(%arg0: i32, %arg1: memref<8x160xf32, #tpu.memory_space<vmem>>, %arg2: memref<8x160xf32, #tpu.memory_space<vmem>>, %arg3: memref<160x32xf32, #tpu.memory_space<vmem>>, %arg4: memref<1x32xf32, #tpu.memory_space<vmem>>, %arg5: memref<160x32xf32, #tpu.memory_space<vmem>>, %arg6: memref<1x32xf32, #tpu.memory_space<vmem>>, %arg7: memref<32x64xf32, #tpu.memory_space<vmem>>, %arg8: memref<1x64xf32, #tpu.memory_space<vmem>>, %arg9: memref<64x2xf32, #tpu.memory_space<vmem>>, %arg10: memref<1x2xf32, #tpu.memory_space<vmem>>, %arg11: memref<8x2xf32, #tpu.memory_space<vmem>>) attributes {dimension_semantics = [#tpu.dimension_semantics<parallel>], iteration_bounds = array<i64: 1>, scalar_prefetch = 0 : i64, scratch_operands = 0 : i64, tpu.core_type = #tpu.core_type<tc>, window_params = [{transform_indices = @transform_0, window_bounds = array<i64: 8, 160>}, {transform_indices = @transform_1, window_bounds = array<i64: 8, 160>}, {pipeline_mode = #tpu.pipeline_mode<synchronous>, transform_indices = @transform_2, window_bounds = array<i64: 160, 32>}, {pipeline_mode = #tpu.pipeline_mode<synchronous>, transform_indices = @transform_3, window_bounds = array<i64: 1, 32>}, {pipeline_mode = #tpu.pipeline_mode<synchronous>, transform_indices = @transform_4, window_bounds = array<i64: 160, 32>}, {pipeline_mode = #tpu.pipeline_mode<synchronous>, transform_indices = @transform_5, window_bounds = array<i64: 1, 32>}, {pipeline_mode = #tpu.pipeline_mode<synchronous>, transform_indices = @transform_6, window_bounds = array<i64: 32, 64>}, {pipeline_mode = #tpu.pipeline_mode<synchronous>, transform_indices = @transform_7, window_bounds = array<i64: 1, 64>}, {pipeline_mode = #tpu.pipeline_mode<synchronous>, transform_indices = @transform_8, window_bounds = array<i64: 64, 2>}, {pipeline_mode = #tpu.pipeline_mode<synchronous>, transform_indices = @transform_9, window_bounds = array<i64: 1, 2>}, {transform_indices = @transform_10, window_bounds = array<i64: 8, 2>}]} {
    %c0 = arith.constant 0 : index
    %c0_0 = arith.constant 0 : index
    %0 = vector.load %arg1[%c0, %c0_0] : memref<8x160xf32, #tpu.memory_space<vmem>>, vector<8x160xf32>
    %c0_1 = arith.constant 0 : index
    %c0_2 = arith.constant 0 : index
    %1 = vector.load %arg3[%c0_1, %c0_2] : memref<160x32xf32, #tpu.memory_space<vmem>>, vector<160x32xf32>
    %cst = arith.constant dense<0.000000e+00> : vector<8x32xf32>
    %2 = tpu.matmul %0, %1, %cst {dimension_numbers = #tpu.dot_dimension_numbers<[1], [0], [0], [1], [0, 0, 1, 1], [], []>} : vector<8x160xf32>, vector<160x32xf32>, vector<8x32xf32> -> vector<8x32xf32>
    %c0_3 = arith.constant 0 : index
    %c0_4 = arith.constant 0 : index
    %3 = vector.load %arg4[%c0_3, %c0_4] : memref<1x32xf32, #tpu.memory_space<vmem>>, vector<1x32xf32>
    %4 = vector.broadcast %3 : vector<1x32xf32> to vector<8x32xf32>
    %5 = arith.addf %2, %4 : vector<8x32xf32>
    %cst_5 = arith.constant 0.000000e+00 : f32
    %6 = vector.broadcast %cst_5 : f32 to vector<8x32xf32>
    %7 = arith.maximumf %5, %6 : vector<8x32xf32>
    %c0_6 = arith.constant 0 : index
    %c0_7 = arith.constant 0 : index
    %8 = vector.load %arg2[%c0_6, %c0_7] : memref<8x160xf32, #tpu.memory_space<vmem>>, vector<8x160xf32>
    %c0_8 = arith.constant 0 : index
    %c0_9 = arith.constant 0 : index
    %9 = vector.load %arg5[%c0_8, %c0_9] : memref<160x32xf32, #tpu.memory_space<vmem>>, vector<160x32xf32>
    %cst_10 = arith.constant dense<0.000000e+00> : vector<8x32xf32>
    %10 = tpu.matmul %8, %9, %cst_10 {dimension_numbers = #tpu.dot_dimension_numbers<[1], [0], [0], [1], [0, 0, 1, 1], [], []>} : vector<8x160xf32>, vector<160x32xf32>, vector<8x32xf32> -> vector<8x32xf32>
    %c0_11 = arith.constant 0 : index
    %c0_12 = arith.constant 0 : index
    %11 = vector.load %arg6[%c0_11, %c0_12] : memref<1x32xf32, #tpu.memory_space<vmem>>, vector<1x32xf32>
    %12 = vector.broadcast %11 : vector<1x32xf32> to vector<8x32xf32>
    %13 = arith.addf %10, %12 : vector<8x32xf32>
    %cst_13 = arith.constant 0.000000e+00 : f32
    %14 = vector.broadcast %cst_13 : f32 to vector<8x32xf32>
    %15 = arith.maximumf %13, %14 : vector<8x32xf32>
    %16 = arith.addf %7, %15 : vector<8x32xf32>
    %cst_14 = arith.constant 5.000000e-01 : f32
    %17 = vector.broadcast %cst_14 : f32 to vector<8x32xf32>
    %18 = arith.mulf %16, %17 : vector<8x32xf32>
    %c0_15 = arith.constant 0 : index
    %c0_16 = arith.constant 0 : index
    %19 = vector.load %arg7[%c0_15, %c0_16] : memref<32x64xf32, #tpu.memory_space<vmem>>, vector<32x64xf32>
    %cst_17 = arith.constant dense<0.000000e+00> : vector<8x64xf32>
    %20 = tpu.matmul %18, %19, %cst_17 {dimension_numbers = #tpu.dot_dimension_numbers<[1], [0], [0], [1], [0, 0, 1, 1], [], []>} : vector<8x32xf32>, vector<32x64xf32>, vector<8x64xf32> -> vector<8x64xf32>
    %c0_18 = arith.constant 0 : index
    %c0_19 = arith.constant 0 : index
    %21 = vector.load %arg8[%c0_18, %c0_19] : memref<1x64xf32, #tpu.memory_space<vmem>>, vector<1x64xf32>
    %22 = vector.broadcast %21 : vector<1x64xf32> to vector<8x64xf32>
    %23 = arith.addf %20, %22 : vector<8x64xf32>
    %cst_20 = arith.constant 0.000000e+00 : f32
    %24 = vector.broadcast %cst_20 : f32 to vector<8x64xf32>
    %25 = arith.maximumf %23, %24 : vector<8x64xf32>
    %c0_21 = arith.constant 0 : index
    %c0_22 = arith.constant 0 : index
    %26 = vector.load %arg9[%c0_21, %c0_22] : memref<64x2xf32, #tpu.memory_space<vmem>>, vector<64x2xf32>
    %cst_23 = arith.constant dense<0.000000e+00> : vector<8x2xf32>
    %27 = tpu.matmul %25, %26, %cst_23 {dimension_numbers = #tpu.dot_dimension_numbers<[1], [0], [0], [1], [0, 0, 1, 1], [], []>} : vector<8x64xf32>, vector<64x2xf32>, vector<8x2xf32> -> vector<8x2xf32>
    %c0_24 = arith.constant 0 : index
    %c0_25 = arith.constant 0 : index
    %28 = vector.load %arg10[%c0_24, %c0_25] : memref<1x2xf32, #tpu.memory_space<vmem>>, vector<1x2xf32>
    %29 = vector.broadcast %28 : vector<1x2xf32> to vector<8x2xf32>
    %30 = arith.addf %27, %29 : vector<8x2xf32>
    %c0_26 = arith.constant 0 : index
    %c0_27 = arith.constant 0 : index
    %31 = vector.load %arg11[%c0_26, %c0_27] : memref<8x2xf32, #tpu.memory_space<vmem>>, vector<8x2xf32>
    tpu.vector_store %arg11[%c0_26, %c0_27], %30 {strides = array<i32>} : memref<8x2xf32, #tpu.memory_space<vmem>>, vector<8x2xf32>,
    return
  }
  func.func @transform_0(%arg0: i32) -> (i32, i32) {
    %c0_i32 = arith.constant 0 : i32
    %c0_i32_0 = arith.constant 0 : i32
    return %arg0, %c0_i32 : i32, i32
  }
  func.func @transform_1(%arg0: i32) -> (i32, i32) {
    %c0_i32 = arith.constant 0 : i32
    %c0_i32_0 = arith.constant 0 : i32
    return %arg0, %c0_i32 : i32, i32
  }
  func.func @transform_2(%arg0: i32) -> (i32, i32) {
    %c0_i32 = arith.constant 0 : i32
    %c0_i32_0 = arith.constant 0 : i32
    %c0_i32_1 = arith.constant 0 : i32
    return %c0_i32, %c0_i32_0 : i32, i32
  }
  func.func @transform_3(%arg0: i32) -> (i32, i32) {
    %c0_i32 = arith.constant 0 : i32
    %c0_i32_0 = arith.constant 0 : i32
    %c0_i32_1 = arith.constant 0 : i32
    return %c0_i32, %c0_i32_0 : i32, i32
  }
  func.func @transform_4(%arg0: i32) -> (i32, i32) {
    %c0_i32 = arith.constant 0 : i32
    %c0_i32_0 = arith.constant 0 : i32
    %c0_i32_1 = arith.constant 0 : i32
    return %c0_i32, %c0_i32_0 : i32, i32
  }
  func.func @transform_5(%arg0: i32) -> (i32, i32) {
    %c0_i32 = arith.constant 0 : i32
    %c0_i32_0 = arith.constant 0 : i32
    %c0_i32_1 = arith.constant 0 : i32
    return %c0_i32, %c0_i32_0 : i32, i32
  }
  func.func @transform_6(%arg0: i32) -> (i32, i32) {
    %c0_i32 = arith.constant 0 : i32
    %c0_i32_0 = arith.constant 0 : i32
    %c0_i32_1 = arith.constant 0 : i32
    return %c0_i32, %c0_i32_0 : i32, i32
  }
  func.func @transform_7(%arg0: i32) -> (i32, i32) {
    %c0_i32 = arith.constant 0 : i32
    %c0_i32_0 = arith.constant 0 : i32
    %c0_i32_1 = arith.constant 0 : i32
    return %c0_i32, %c0_i32_0 : i32, i32
  }
  func.func @transform_8(%arg0: i32) -> (i32, i32) {
    %c0_i32 = arith.constant 0 : i32
    %c0_i32_0 = arith.constant 0 : i32
    %c0_i32_1 = arith.constant 0 : i32
    return %c0_i32, %c0_i32_0 : i32, i32
  }
  func.func @transform_9(%arg0: i32) -> (i32, i32) {
    %c0_i32 = arith.constant 0 : i32
    %c0_i32_0 = arith.constant 0 : i32
    %c0_i32_1 = arith.constant 0 : i32
    return %c0_i32, %c0_i32_0 : i32, i32
  }
  func.func @transform_10(%arg0: i32) -> (i32, i32) {
    %c0_i32 = arith.constant 0 : i32
    %c0_i32_0 = arith.constant 0 : i32
    return %arg0, %c0_i32 : i32, i32
  }
}

</mosaic_0001>

<llo_original>
// kernel: splitnn_forward.1
$region0: #{splitnn_forward.1}
  #allocation0 [shape = 'u32[]', space=smem, size = 0x4, offset = 0x4, fixed_abs, tag = 'smem constant byte address 0x4 - core index']
  #allocation1 [shape = 'u32[144,128]{1,0:T(1,128)}', space=vmem, size = 0x12000, scoped, tag = 'internal scratch']
  %s0 = inlined_call_operand.vmem [shape: f32[8,160], index: 0, kind: input, shape index: {}]
  %s1 = inlined_call_operand.vmem [shape: f32[8,160], index: 1, kind: input, shape index: {}]
  %s2 = inlined_call_operand.vmem [shape: f32[160,32], index: 2, kind: input, shape index: {}]
  %s3 = inlined_call_operand.vmem [shape: f32[1,32], index: 3, kind: input, shape index: {}]
  %s4 = inlined_call_operand.vmem [shape: f32[160,32], index: 4, kind: input, shape index: {}]
  %s5 = inlined_call_operand.vmem [shape: f32[1,32], index: 5, kind: input, shape index: {}]
  %s6 = inlined_call_operand.vmem [shape: f32[32,64], index: 6, kind: input, shape index: {}]
  %s7 = inlined_call_operand.vmem [shape: f32[1,64], index: 7, kind: input, shape index: {}]
  %s8 = inlined_call_operand.vmem [shape: f32[64,2], index: 8, kind: input, shape index: {}]
  %s9 = inlined_call_operand.vmem [shape: f32[1,2], index: 9, kind: input, shape index: {}]
  %s10 = inlined_call_operand.vmem [shape: f32[8,2], index: 10, kind: output, shape index: {}]
  %s11 = sld [smem:[#allocation0]]
  $region50: #{splitnn_forward.1} parent=0
    _
  %s13 = ssub.s32 1, %s11
  %s14 = scalar_select 0, %s13, %s11
  // Predicated region
  $region2: #{splitnn_forward.1} parent=0 // pred_check
    _
  $region3: #{splitnn_forward.1} parent=0 // pred_check_branch
    %16 = sbr.rel (0) target = $region5
  $region4: #{splitnn_forward.1} parent=0 // pred_region
    _
  $region5: #{splitnn_forward.1} parent=0 // pred_fallthru
    _
  // Predicated region
  $region6: #{splitnn_forward.1} parent=0 // pred_check
    _
  $region7: #{splitnn_forward.1} parent=0 // pred_check_branch
    %18 = sbr.rel (0) target = $region9
  $region8: #{splitnn_forward.1} parent=0 // pred_region
    _
  $region9: #{splitnn_forward.1} parent=0 // pred_fallthru
    _
  // Predicated region
  $region10: #{splitnn_forward.1} parent=0 // pred_check
    _
  $region11: #{splitnn_forward.1} parent=0 // pred_check_branch
    %20 = sbr.rel (0) target = $region13
  $region12: #{splitnn_forward.1} parent=0 // pred_region
    _
  $region13: #{splitnn_forward.1} parent=0 // pred_fallthru
    _
  // Predicated region
  $region14: #{splitnn_forward.1} parent=0 // pred_check
    _
  $region15: #{splitnn_forward.1} parent=0 // pred_check_branch
    %22 = sbr.rel (0) target = $region17
  $region16: #{splitnn_forward.1} parent=0 // pred_region
    _
  $region17: #{splitnn_forward.1} parent=0 // pred_fallthru
    _
  // Predicated region
  $region18: #{splitnn_forward.1} parent=0 // pred_check
    _
  $region19: #{splitnn_forward.1} parent=0 // pred_check_branch
    %24 = sbr.rel (0) target = $region21
  $region20: #{splitnn_forward.1} parent=0 // pred_region
    _
  $region21: #{splitnn_forward.1} parent=0 // pred_fallthru
    _
  // Predicated region
  $region22: #{splitnn_forward.1} parent=0 // pred_check
    _
  $region23: #{splitnn_forward.1} parent=0 // pred_check_branch
    %26 = sbr.rel (0) target = $region25
  $region24: #{splitnn_forward.1} parent=0 // pred_region
    _
  $region25: #{splitnn_forward.1} parent=0 // pred_fallthru
    _
  // Predicated region
  $region26: #{splitnn_forward.1} parent=0 // pred_check
    _
  $region27: #{splitnn_forward.1} parent=0 // pred_check_branch
    %28 = sbr.rel (0) target = $region29
  $region28: #{splitnn_forward.1} parent=0 // pred_region
    _
  $region29: #{splitnn_forward.1} parent=0 // pred_fallthru
    _
  // Predicated region
  $region30: #{splitnn_forward.1} parent=0 // pred_check
    _
  $region31: #{splitnn_forward.1} parent=0 // pred_check_branch
    %30 = sbr.rel (0) target = $region33
  $region32: #{splitnn_forward.1} parent=0 // pred_region
    _
  $region33: #{splitnn_forward.1} parent=0 // pred_fallthru
    _
  // Predicated region
  $region34: #{splitnn_forward.1} parent=0 // pred_check
    _
  $region35: #{splitnn_forward.1} parent=0 // pred_check_branch
    %32 = sbr.rel (0) target = $region37
  $region36: #{splitnn_forward.1} parent=0 // pred_region
    _
  $region37: #{splitnn_forward.1} parent=0 // pred_fallthru
    _
  // Predicated region
  $region38: #{splitnn_forward.1} parent=0 // pred_check
    _
  $region39: #{splitnn_forward.1} parent=0 // pred_check_branch
    %34 = sbr.rel (0) target = $region41
  $region40: #{splitnn_forward.1} parent=0 // pred_region
    _
  $region41: #{splitnn_forward.1} parent=0 // pred_fallthru
    _
  %v35 = vld [vmem:[%s0] sm:$0xff]
  %v36 = vld [vmem:[%s0 + $0x8] sm:$0xff]
  %v37 = vld [vmem:[%s2] sm:$0xff]
  %v38 = vld [vmem:[%s2 + $0x8] sm:$0xff]
  %v39 = vld [vmem:[%s2 + $0x10] sm:$0xff]
  %v40 = vld [vmem:[%s2 + $0x18] sm:$0xff]
  %v41 = vld [vmem:[%s2 + $0x20] sm:$0xff]
  %v42 = vld [vmem:[%s2 + $0x28] sm:$0xff]
  %v43 = vld [vmem:[%s2 + $0x30] sm:$0xff]
  %v44 = vld [vmem:[%s2 + $0x38] sm:$0xff]
  %v45 = vld [vmem:[%s2 + $0x40] sm:$0xff]
  %v46 = vld [vmem:[%s2 + $0x48] sm:$0xff]
  %v47 = vld [vmem:[%s2 + $0x50] sm:$0xff]
  %v48 = vld [vmem:[%s2 + $0x58] sm:$0xff]
  %v49 = vld [vmem:[%s2 + $0x60] sm:$0xff]
  %v50 = vld [vmem:[%s2 + $0x68] sm:$0xff]
  %v51 = vld [vmem:[%s2 + $0x70] sm:$0xff]
  %v52 = vld [vmem:[%s2 + $0x78] sm:$0xff]
  %v53 = vld [vmem:[%s2 + $0x80] sm:$0xff]
  %v54 = vld [vmem:[%s2 + $0x88] sm:$0xff]
  %v55 = vld [vmem:[%s2 + $0x90] sm:$0xff]
  %v56 = vld [vmem:[%s2 + $0x98] sm:$0xff]
  %v57 = vld [vmem:[%s3] sm:$0x1]
  %v59 = vlaneseq
  %v60 = vshrl.u32 %v59, 7
  %v61 = vsub.s32 0, %v60
  %v62 = vrot.slane %v57, %v61
  %vm64 = vcmask 261120
  %v66 = vsel %vm64, %v36, 0
  %68 = vmatprep.subr.mxu0 0.0
  %69 = vmatpush1.msra.mxu0 %v37
  %70 = vmatprep.subr.mxu0 0.0
  %71 = vmatpush1.msra.mxu0 %v38
  %72 = vmatprep.subr.mxu0 0.0
  %73 = vmatpush1.msra.mxu0 %v39
  %74 = vmatprep.subr.mxu0 0.0
  %75 = vmatpush1.msra.mxu0 %v40
  %76 = vmatprep.subr.mxu0 0.0
  %77 = vmatpush1.msra.mxu0 %v41
  %78 = vmatprep.subr.mxu0 0.0
  %79 = vmatpush1.msra.mxu0 %v42
  %80 = vmatprep.subr.mxu0 0.0
  %81 = vmatpush1.msra.mxu0 %v43
  %82 = vmatprep.subr.mxu0 0.0
  %83 = vmatpush1.msra.mxu0 %v44
  %84 = vmatprep.subr.mxu0 0.0
  %85 = vmatpush1.msra.mxu0 %v45
  %86 = vmatprep.subr.mxu0 0.0
  %87 = vmatpush1.msra.mxu0 %v46
  %88 = vmatprep.subr.mxu0 0.0
  %89 = vmatpush1.msra.mxu0 %v47
  %90 = vmatprep.subr.mxu0 0.0
  %91 = vmatpush1.msra.mxu0 %v48
  %92 = vmatprep.subr.mxu0 0.0
  %93 = vmatpush1.msra.mxu0 %v49
  %94 = vmatprep.subr.mxu0 0.0
  %95 = vmatpush1.msra.mxu0 %v50
  %96 = vmatprep.subr.mxu0 0.0
  %97 = vmatpush1.msra.mxu0 %v51
  %98 = vmatprep.subr.mxu0 0.0
  %99 = vmatpush1.msra.mxu0 %v52
  %100 = vmatprep.subr.mxu0 0.0
  %101 = vmatpush1.msra.mxu0 %v53
  %102 = vmatprep.subr.mxu0 0.0
  %103 = vmatpush1.msra.mxu0 %v54
  %104 = vmatprep.subr.mxu0 0.0
  %105 = vmatpush1.msra.mxu0 %v55
  %106 = vmatprep.subr.mxu0 0.0
  %107 = vmatpush1.msra.mxu0 %v56
  %108 = vmatprep.subr.mxu0 0.0
  %109 = vmatpush1.msra.mxu0 0.0
  %110 = vmatprep.subr.mxu0 0.0
  %111 = vmatpush1.msra.mxu0 0.0
  %112 = vmatprep.subr.mxu0 0.0
  %113 = vmatpush1.msra.mxu0 0.0
  %114 = vmatprep.subr.mxu0 0.0
  %115 = vmatpush1.msra.mxu0 0.0
  %116 = vmatprep.subr.mxu0 0.0
  %117 = vmatpush1.msra.mxu0 0.0
  %118 = vmatprep.subr.mxu0 0.0
  %119 = vmatpush1.msra.mxu0 0.0
  %120 = vmatprep.subr.mxu0 0.0
  %121 = vmatpush1.msra.mxu0 0.0
  %122 = vmatprep.subr.mxu0 0.0
  %123 = vmatpush1.msra.mxu0 0.0
  %124 = vmatprep.subr.mxu0 0.0
  %125 = vmatpush1.msra.mxu0 0.0
  %126 = vmatprep.subr.mxu0 0.0
  %127 = vmatpush1.msra.mxu0 0.0
  %128 = vmatprep.subr.mxu0 0.0
  %129 = vmatpush1.msra.mxu0 0.0
  %130 = vmatprep.subr.mxu0 0.0
  %131 = vmatpush1.msra.mxu0 0.0
  %132 = vmatprep.mubr.f32.mxu0 %v66
  %133 = vmatmul.mubr.f32.gmra.mrb[0].mxu0 %v35
  %v134 = vpop.f32.mrb[0].mxu0
  %v135 = vadd.f32 %v62, %v134
  %v136 = vpop.f32.mrb[0].mxu0
  %137 = vdwg.mxu0
  %v138 = vmax.f32 %v135, 0.0
  %v139 = vld [vmem:[%s1] sm:$0xff]
  %v140 = vld [vmem:[%s1 + $0x8] sm:$0xff]
  %v141 = vld [vmem:[%s4] sm:$0xff]
  %v142 = vld [vmem:[%s4 + $0x8] sm:$0xff]
  %v143 = vld [vmem:[%s4 + $0x10] sm:$0xff]
  %v144 = vld [vmem:[%s4 + $0x18] sm:$0xff]
  %v145 = vld [vmem:[%s4 + $0x20] sm:$0xff]
  %v146 = vld [vmem:[%s4 + $0x28] sm:$0xff]
  %v147 = vld [vmem:[%s4 + $0x30] sm:$0xff]
  %v148 = vld [vmem:[%s4 + $0x38] sm:$0xff]
  %v149 = vld [vmem:[%s4 + $0x40] sm:$0xff]
  %v150 = vld [vmem:[%s4 + $0x48] sm:$0xff]
  %v151 = vld [vmem:[%s4 + $0x50] sm:$0xff]
  %v152 = vld [vmem:[%s4 + $0x58] sm:$0xff]
  %v153 = vld [vmem:[%s4 + $0x60] sm:$0xff]
  %v154 = vld [vmem:[%s4 + $0x68] sm:$0xff]
  %v155 = vld [vmem:[%s4 + $0x70] sm:$0xff]
  %v156 = vld [vmem:[%s4 + $0x78] sm:$0xff]
  %v157 = vld [vmem:[%s4 + $0x80] sm:$0xff]
  %v158 = vld [vmem:[%s4 + $0x88] sm:$0xff]
  %v159 = vld [vmem:[%s4 + $0x90] sm:$0xff]
  %v160 = vld [vmem:[%s4 + $0x98] sm:$0xff]
  %v161 = vld [vmem:[%s5] sm:$0x1]
  %v163 = vlaneseq
  %v164 = vshrl.u32 %v163, 7
  %v165 = vsub.s32 0, %v164
  %v166 = vrot.slane %v161, %v165
  %v169 = vsel %vm64, %v140, 0
  %171 = vmatprep.subr.mxu0 0.0
  %172 = vmatpush1.msra.mxu0 %v141
  %173 = vmatprep.subr.mxu0 0.0
  %174 = vmatpush1.msra.mxu0 %v142
  %175 = vmatprep.subr.mxu0 0.0
  %176 = vmatpush1.msra.mxu0 %v143
  %177 = vmatprep.subr.mxu0 0.0
  %178 = vmatpush1.msra.mxu0 %v144
  %179 = vmatprep.subr.mxu0 0.0
  %180 = vmatpush1.msra.mxu0 %v145
  %181 = vmatprep.subr.mxu0 0.0
  %182 = vmatpush1.msra.mxu0 %v146
  %183 = vmatprep.subr.mxu0 0.0
  %184 = vmatpush1.msra.mxu0 %v147
  %185 = vmatprep.subr.mxu0 0.0
  %186 = vmatpush1.msra.mxu0 %v148
  %187 = vmatprep.subr.mxu0 0.0
  %188 = vmatpush1.msra.mxu0 %v149
  %189 = vmatprep.subr.mxu0 0.0
  %190 = vmatpush1.msra.mxu0 %v150
  %191 = vmatprep.subr.mxu0 0.0
  %192 = vmatpush1.msra.mxu0 %v151
  %193 = vmatprep.subr.mxu0 0.0
  %194 = vmatpush1.msra.mxu0 %v152
  %195 = vmatprep.subr.mxu0 0.0
  %196 = vmatpush1.msra.mxu0 %v153
  %197 = vmatprep.subr.mxu0 0.0
  %198 = vmatpush1.msra.mxu0 %v154
  %199 = vmatprep.subr.mxu0 0.0
  %200 = vmatpush1.msra.mxu0 %v155
  %201 = vmatprep.subr.mxu0 0.0
  %202 = vmatpush1.msra.mxu0 %v156
  %203 = vmatprep.subr.mxu0 0.0
  %204 = vmatpush1.msra.mxu0 %v157
  %205 = vmatprep.subr.mxu0 0.0
  %206 = vmatpush1.msra.mxu0 %v158
  %207 = vmatprep.subr.mxu0 0.0
  %208 = vmatpush1.msra.mxu0 %v159
  %209 = vmatprep.subr.mxu0 0.0
  %210 = vmatpush1.msra.mxu0 %v160
  %211 = vmatprep.subr.mxu0 0.0
  %212 = vmatpush1.msra.mxu0 0.0
  %213 = vmatprep.subr.mxu0 0.0
  %214 = vmatpush1.msra.mxu0 0.0
  %215 = vmatprep.subr.mxu0 0.0
  %216 = vmatpush1.msra.mxu0 0.0
  %217 = vmatprep.subr.mxu0 0.0
  %218 = vmatpush1.msra.mxu0 0.0
  %219 = vmatprep.subr.mxu0 0.0
  %220 = vmatpush1.msra.mxu0 0.0
  %221 = vmatprep.subr.mxu0 0.0
  %222 = vmatpush1.msra.mxu0 0.0
  %223 = vmatprep.subr.mxu0 0.0
  %224 = vmatpush1.msra.mxu0 0.0
  %225 = vmatprep.subr.mxu0 0.0
  %226 = vmatpush1.msra.mxu0 0.0
  %227 = vmatprep.subr.mxu0 0.0
  %228 = vmatpush1.msra.mxu0 0.0
  %229 = vmatprep.subr.mxu0 0.0
  %230 = vmatpush1.msra.mxu0 0.0
  %231 = vmatprep.subr.mxu0 0.0
  %232 = vmatpush1.msra.mxu0 0.0
  %233 = vmatprep.subr.mxu0 0.0
  %234 = vmatpush1.msra.mxu0 0.0
  %235 = vmatprep.mubr.f32.mxu0 %v169
  %236 = vmatmul.mubr.f32.gmra.mrb[0].mxu0 %v139
  %v237 = vpop.f32.mrb[0].mxu0
  %v238 = vadd.f32 %v166, %v237
  %v239 = vpop.f32.mrb[0].mxu0
  %240 = vdwg.mxu0
  %v241 = vmax.f32 %v238, 0.0
  %v242 = vadd.f32 %v138, %v241
  %v243 = vmul.f32 %v242, 0.5
  %v244 = vld [vmem:[%s6] sm:$0xff]
  %v245 = vld [vmem:[%s6 + $0x8] sm:$0xff]
  %v246 = vld [vmem:[%s6 + $0x10] sm:$0xff]
  %v247 = vld [vmem:[%s6 + $0x18] sm:$0xff]
  %v248 = vld [vmem:[%s7] sm:$0x1]
  %v250 = vlaneseq
  %v251 = vshrl.u32 %v250, 7
  %v252 = vsub.s32 0, %v251
  %v253 = vrot.slane %v248, %v252
  %v256 = vsel %vm64, %v243, 0
  %258 = vmatprep.subr.mxu0 0.0
  %259 = vmatpush1.msra.mxu0 %v244
  %260 = vmatprep.subr.mxu0 0.0
  %261 = vmatpush1.msra.mxu0 %v245
  %262 = vmatprep.subr.mxu0 0.0
  %263 = vmatpush1.msra.mxu0 %v246
  %264 = vmatprep.subr.mxu0 0.0
  %265 = vmatpush1.msra.mxu0 %v247
  %266 = vmatprep.subr.mxu0 0.0
  %267 = vmatpush1.msra.mxu0 0.0
  %268 = vmatprep.subr.mxu0 0.0
  %269 = vmatpush1.msra.mxu0 0.0
  %270 = vmatprep.subr.mxu0 0.0
  %271 = vmatpush1.msra.mxu0 0.0
  %272 = vmatprep.subr.mxu0 0.0
  %273 = vmatpush1.msra.mxu0 0.0
  %274 = vmatprep.subr.mxu0 0.0
  %275 = vmatpush1.msra.mxu0 0.0
  %276 = vmatprep.subr.mxu0 0.0
  %277 = vmatpush1.msra.mxu0 0.0
  %278 = vmatprep.subr.mxu0 0.0
  %279 = vmatpush1.msra.mxu0 0.0
  %280 = vmatprep.subr.mxu0 0.0
  %281 = vmatpush1.msra.mxu0 0.0
  %282 = vmatprep.subr.mxu0 0.0
  %283 = vmatpush1.msra.mxu0 0.0
  %284 = vmatprep.subr.mxu0 0.0
  %285 = vmatpush1.msra.mxu0 0.0
  %286 = vmatprep.subr.mxu0 0.0
  %287 = vmatpush1.msra.mxu0 0.0
  %288 = vmatprep.subr.mxu0 0.0
  %289 = vmatpush1.msra.mxu0 0.0
  %290 = vmatprep.subr.mxu0 0.0
  %291 = vmatpush1.msra.mxu0 0.0
  %292 = vmatprep.subr.mxu0 0.0
  %293 = vmatpush1.msra.mxu0 0.0
  %294 = vmatprep.subr.mxu0 0.0
  %295 = vmatpush1.msra.mxu0 0.0
  %296 = vmatprep.subr.mxu0 0.0
  %297 = vmatpush1.msra.mxu0 0.0
  %298 = vmatprep.subr.mxu0 0.0
  %299 = vmatpush1.msra.mxu0 0.0
  %300 = vmatprep.subr.mxu0 0.0
  %301 = vmatpush1.msra.mxu0 0.0
  %302 = vmatprep.subr.mxu0 0.0
  %303 = vmatpush1.msra.mxu0 0.0
  %304 = vmatprep.subr.mxu0 0.0
  %305 = vmatpush1.msra.mxu0 0.0
  %306 = vmatprep.subr.mxu0 0.0
  %307 = vmatpush1.msra.mxu0 0.0
  %308 = vmatprep.subr.mxu0 0.0
  %309 = vmatpush1.msra.mxu0 0.0
  %310 = vmatprep.subr.mxu0 0.0
  %311 = vmatpush1.msra.mxu0 0.0
  %312 = vmatprep.subr.mxu0 0.0
  %313 = vmatpush1.msra.mxu0 0.0
  %314 = vmatprep.subr.mxu0 0.0
  %315 = vmatpush1.msra.mxu0 0.0
  %316 = vmatprep.subr.mxu0 0.0
  %317 = vmatpush1.msra.mxu0 0.0
  %318 = vmatprep.subr.mxu0 0.0
  %319 = vmatpush1.msra.mxu0 0.0
  %320 = vmatprep.subr.mxu0 0.0
  %321 = vmatpush1.msra.mxu0 0.0
  %322 = vmatprep.mubr.f32.mxu0 0.0
  %323 = vmatmul.mubr.f32.gmra.mrb[0].mxu0 %v256
  %v324 = vpop.f32.mrb[0].mxu0
  %v325 = vadd.f32 %v253, %v324
  %v326 = vpop.f32.mrb[0].mxu0
  %327 = vdwg.mxu0
  %v328 = vmax.f32 %v325, 0.0
  %v329 = vld [vmem:[%s8] sm:$0xff]
  %v330 = vld [vmem:[%s8 + $0x8] sm:$0xff]
  %v331 = vld [vmem:[%s8 + $0x10] sm:$0xff]
  %v332 = vld [vmem:[%s8 + $0x18] sm:$0xff]
  %v333 = vld [vmem:[%s8 + $0x20] sm:$0xff]
  %v334 = vld [vmem:[%s8 + $0x28] sm:$0xff]
  %v335 = vld [vmem:[%s8 + $0x30] sm:$0xff]
  %v336 = vld [vmem:[%s8 + $0x38] sm:$0xff]
  %v337 = vld [vmem:[%s9] sm:$0x1]
  %v339 = vlaneseq
  %v340 = vshrl.u32 %v339, 7
  %v341 = vsub.s32 0, %v340
  %v342 = vrot.slane %v337, %v341
  %vm344 = vcmask 523264
  %v346 = vsel %vm344, %v328, 0
  %348 = vmatprep.subr.mxu0 0.0
  %349 = vmatpush1.msra.mxu0 %v329
  %350 = vmatprep.subr.mxu0 0.0
  %351 = vmatpush1.msra.mxu0 %v330
  %352 = vmatprep.subr.mxu0 0.0
  %353 = vmatpush1.msra.mxu0 %v331
  %354 = vmatprep.subr.mxu0 0.0
  %355 = vmatpush1.msra.mxu0 %v332
  %356 = vmatprep.subr.mxu0 0.0
  %357 = vmatpush1.msra.mxu0 %v333
  %358 = vmatprep.subr.mxu0 0.0
  %359 = vmatpush1.msra.mxu0 %v334
  %360 = vmatprep.subr.mxu0 0.0
  %361 = vmatpush1.msra.mxu0 %v335
  %362 = vmatprep.subr.mxu0 0.0
  %363 = vmatpush1.msra.mxu0 %v336
  %364 = vmatprep.subr.mxu0 0.0
  %365 = vmatpush1.msra.mxu0 0.0
  %366 = vmatprep.subr.mxu0 0.0
  %367 = vmatpush1.msra.mxu0 0.0
  %368 = vmatprep.subr.mxu0 0.0
  %369 = vmatpush1.msra.mxu0 0.0
  %370 = vmatprep.subr.mxu0 0.0
  %371 = vmatpush1.msra.mxu0 0.0
  %372 = vmatprep.subr.mxu0 0.0
  %373 = vmatpush1.msra.mxu0 0.0
  %374 = vmatprep.subr.mxu0 0.0
  %375 = vmatpush1.msra.mxu0 0.0
  %376 = vmatprep.subr.mxu0 0.0
  %377 = vmatpush1.msra.mxu0 0.0
  %378 = vmatprep.subr.mxu0 0.0
  %379 = vmatpush1.msra.mxu0 0.0
  %380 = vmatprep.subr.mxu0 0.0
  %381 = vmatpush1.msra.mxu0 0.0
  %382 = vmatprep.subr.mxu0 0.0
  %383 = vmatpush1.msra.mxu0 0.0
  %384 = vmatprep.subr.mxu0 0.0
  %385 = vmatpush1.msra.mxu0 0.0
  %386 = vmatprep.subr.mxu0 0.0
  %387 = vmatpush1.msra.mxu0 0.0
  %388 = vmatprep.subr.mxu0 0.0
  %389 = vmatpush1.msra.mxu0 0.0
  %390 = vmatprep.subr.mxu0 0.0
  %391 = vmatpush1.msra.mxu0 0.0
  %392 = vmatprep.subr.mxu0 0.0
  %393 = vmatpush1.msra.mxu0 0.0
  %394 = vmatprep.subr.mxu0 0.0
  %395 = vmatpush1.msra.mxu0 0.0
  %396 = vmatprep.subr.mxu0 0.0
  %397 = vmatpush1.msra.mxu0 0.0
  %398 = vmatprep.subr.mxu0 0.0
  %399 = vmatpush1.msra.mxu0 0.0
  %400 = vmatprep.subr.mxu0 0.0
  %401 = vmatpush1.msra.mxu0 0.0
  %402 = vmatprep.subr.mxu0 0.0
  %403 = vmatpush1.msra.mxu0 0.0
  %404 = vmatprep.subr.mxu0 0.0
  %405 = vmatpush1.msra.mxu0 0.0
  %406 = vmatprep.subr.mxu0 0.0
  %407 = vmatpush1.msra.mxu0 0.0
  %408 = vmatprep.subr.mxu0 0.0
  %409 = vmatpush1.msra.mxu0 0.0
  %410 = vmatprep.subr.mxu0 0.0
  %411 = vmatpush1.msra.mxu0 0.0
  %412 = vmatprep.mubr.f32.mxu0 0.0
  %413 = vmatmul.mubr.f32.gmra.mrb[0].mxu0 %v346
  %v414 = vpop.f32.mrb[0].mxu0
  %v415 = vadd.f32 %v342, %v414
  %v416 = vpop.f32.mrb[0].mxu0
  %417 = vdwg.mxu0
  %vm418 = vcmask 15360
  %419 = vst.msk [vmem:[%s10] sm:$0xff] %vm418, %v415
  // Predicated region
  $region42: #{splitnn_forward.1} parent=0 // pred_check
    _
  $region43: #{splitnn_forward.1} parent=0 // pred_check_branch
    %421 = sbr.rel (0) target = $region45
  $region44: #{splitnn_forward.1} parent=0 // pred_region
    _
  $region45: #{splitnn_forward.1} parent=0 // pred_fallthru
    _
  // Predicated region
  $region46: #{splitnn_forward.1} parent=0 // pred_check
    _
  $region47: #{splitnn_forward.1} parent=0 // pred_check_branch
    %423 = sbr.rel (0) target = $region49
  $region48: #{splitnn_forward.1} parent=0 // pred_region
    _
  $region49: #{splitnn_forward.1} parent=0 // pred_fallthru
    _

</llo_original>
